<compile_context>
chip_gen: v6e
topology: v6e:2x2x1
jax: 0.10.0
libtpu: 0.0.40
codegen_flags: <defaults>
</compile_context>

<pallas_src>
import functools

import jax
import jax.numpy as jnp
from jax.experimental import pallas as pl
from jax.experimental.pallas import tpu as pltpu

LANES = 128


def _thresholded_mae_kernel(pred_ref, targ_ref, out_ref, *, threshold,
                            weight_ratio, compute_dtype):
    # Cast in VMEM (VPU has large slack on a mem-bound op); mirrors PyTorch's
    # promotion of both operands to the wider dtype before compare / subtract.
    pred = pred_ref[...].astype(compute_dtype)
    targ = targ_ref[...].astype(compute_dtype)
    abs_err = jnp.abs(pred - targ)                     # L1Loss(reduction='none')
    out = jnp.where(targ > threshold, abs_err, weight_ratio * abs_err)
    out_ref[...] = out.astype(out_ref.dtype)


def _round_up(x, m):
    return ((x + m - 1) // m) * m


def thresholded_mae_loss(prediction, target, *, threshold=0.02, weight_ratio=0.1,
                         max_tile_rows=2048, min_blocks=4):
    assert prediction.shape == target.shape
    orig_shape = prediction.shape
    n_elem = prediction.size

    # PyTorch: weight = torch.where(..., 1.0, 0.1) is float32, so the result is
    # promote(pred, target, float32).
    out_dtype = jnp.promote_types(
        jnp.promote_types(prediction.dtype, target.dtype), jnp.float32)
    compute_dtype = out_dtype

    pred_flat = prediction.reshape(-1)   # contiguous reshape: free
    targ_flat = target.reshape(-1)

    rows = n_elem // LANES
    rem = n_elem - rows * LANES

    out_parts = []

    if rows > 0:
        prefix = rows * LANES
        pred2d = (pred_flat if rem == 0 else pred_flat[:prefix]).reshape(rows, LANES)
        targ2d = (targ_flat if rem == 0 else targ_flat[:prefix]).reshape(rows, LANES)

        # Tiling: aim for >= min_blocks grid steps (pipelining + both v7x TCs),
        # cap block rows at max_tile_rows (1 MiB f32 block -> 6 MiB pipelined).
        if rows < 8:
            tr = rows                                     # full-dim block (tiny input)
        else:
            tr = min(max_tile_rows, _round_up(pl.cdiv(rows, min_blocks), 8))
        grid = (pl.cdiv(rows, tr),)

        kernel = functools.partial(
            _thresholded_mae_kernel,
            threshold=float(threshold),
            weight_ratio=float(weight_ratio),
            compute_dtype=compute_dtype,
        )

        bytes_accessed = prefix * (
            jnp.dtype(prediction.dtype).itemsize
            + jnp.dtype(target.dtype).itemsize
            + jnp.dtype(out_dtype).itemsize
        )

        out2d = pl.pallas_call(
            kernel,
            out_shape=jax.ShapeDtypeStruct((rows, LANES), out_dtype),
            grid_spec=pltpu.PrefetchScalarGridSpec(
                num_scalar_prefetch=0,
                grid=grid,
                in_specs=[
                    pl.BlockSpec((tr, LANES), lambda i: (i, 0)),
                    pl.BlockSpec((tr, LANES), lambda i: (i, 0)),
                ],
                out_specs=pl.BlockSpec((tr, LANES), lambda i: (i, 0)),
            ),
            compiler_params=pltpu.CompilerParams(
                dimension_semantics=("parallel",),        # shards blocks across v7x TCs
            ),
            cost_estimate=pl.CostEstimate(
                flops=3 * prefix,                         # sub + abs/select + mul
                transcendentals=0,
                bytes_accessed=bytes_accessed,
            ),
        )(pred2d, targ2d)
        out_parts.append(out2d.reshape(-1))

    if rem > 0:
        # <128-element ragged tail: tiny XLA epilogue (avoids padding both
        # inputs and re-slicing the output, which would ~2-3x HBM traffic).
        p_t = pred_flat[rows * LANES:].astype(compute_dtype)
        t_t = targ_flat[rows * LANES:].astype(compute_dtype)
        err_t = jnp.abs(p_t - t_t)
        tail = jnp.where(t_t > threshold, err_t, weight_ratio * err_t).astype(out_dtype)
        out_parts.append(tail)

    out_flat = out_parts[0] if len(out_parts) == 1 else jnp.concatenate(out_parts)
    return out_flat.reshape(orig_shape)


if __name__ == "__main__":
    key = jax.random.PRNGKey(0)
    kx, ky = jax.random.split(key)
    # NCHW, small shapes: batch=2, channels=4, spatial=16x16
    pred = jax.random.normal(kx, (2, 4, 16, 16), dtype=jnp.float32)
    targ = jax.random.normal(ky, (2, 4, 16, 16), dtype=jnp.float32)

    threshold, weight_ratio = 0.02, 0.1
    out = thresholded_mae_loss(pred, targ, threshold=threshold,
                               weight_ratio=weight_ratio)
    out = jax.block_until_ready(out)

    # Pure-JAX reference mirroring the PyTorch forward.
    weight = jnp.where(targ > threshold, 1.0, weight_ratio)
    ref = weight * jnp.abs(pred - targ)

    assert out.shape == pred.shape
    assert out.dtype == ref.dtype
    assert jnp.allclose(out, ref, atol=1e-6), "mismatch vs reference"
    print("KERNEL_OK")
</pallas_src>

<mosaic_0001>
module attributes {stable_mosaic.version = 11 : i64} {
  func.func @_thresholded_mae_kernel(%arg0: i32, %arg1: memref<8x128xf32, #tpu.memory_space<vmem>>, %arg2: memref<8x128xf32, #tpu.memory_space<vmem>>, %arg3: memref<8x128xf32, #tpu.memory_space<vmem>>) attributes {dimension_semantics = [#tpu.dimension_semantics<parallel>], iteration_bounds = array<i64: 2>, scalar_prefetch = 0 : i64, scratch_operands = 0 : i64, tpu.core_type = #tpu.core_type<tc>, window_params = [{transform_indices = @transform_0, window_bounds = array<i64: 8, 128>}, {transform_indices = @transform_1, window_bounds = array<i64: 8, 128>}, {transform_indices = @transform_2, window_bounds = array<i64: 8, 128>}]} {
    %c0 = arith.constant 0 : index
    %c0_0 = arith.constant 0 : index
    %0 = vector.load %arg1[%c0, %c0_0] : memref<8x128xf32, #tpu.memory_space<vmem>>, vector<8x128xf32>
    %c0_1 = arith.constant 0 : index
    %c0_2 = arith.constant 0 : index
    %1 = vector.load %arg2[%c0_1, %c0_2] : memref<8x128xf32, #tpu.memory_space<vmem>>, vector<8x128xf32>
    %2 = arith.subf %0, %1 : vector<8x128xf32>
    %3 = math.absf %2 : vector<8x128xf32>
    %cst = arith.constant 2.000000e-02 : f32
    %4 = vector.broadcast %cst : f32 to vector<8x128xf32>
    %5 = arith.cmpf ogt, %1, %4 : vector<8x128xf32>
    %cst_3 = arith.constant 1.000000e-01 : f32
    %6 = vector.broadcast %cst_3 : f32 to vector<8x128xf32>
    %7 = arith.mulf %6, %3 : vector<8x128xf32>
    %8 = arith.select %5, %3, %7 : vector<8x128xi1>, vector<8x128xf32>
    %c0_4 = arith.constant 0 : index
    %c0_5 = arith.constant 0 : index
    %9 = vector.load %arg3[%c0_4, %c0_5] : memref<8x128xf32, #tpu.memory_space<vmem>>, vector<8x128xf32>
    tpu.vector_store %arg3[%c0_4, %c0_5], %8 {strides = array<i32>} : memref<8x128xf32, #tpu.memory_space<vmem>>, vector<8x128xf32>,
    return
  }
  func.func @transform_0(%arg0: i32) -> (i32, i32) {
    %c0_i32 = arith.constant 0 : i32
    %c0_i32_0 = arith.constant 0 : i32
    return %arg0, %c0_i32 : i32, i32
  }
  func.func @transform_1(%arg0: i32) -> (i32, i32) {
    %c0_i32 = arith.constant 0 : i32
    %c0_i32_0 = arith.constant 0 : i32
    return %arg0, %c0_i32 : i32, i32
  }
  func.func @transform_2(%arg0: i32) -> (i32, i32) {
    %c0_i32 = arith.constant 0 : i32
    %c0_i32_0 = arith.constant 0 : i32
    return %arg0, %c0_i32 : i32, i32
  }
}

</mosaic_0001>

<llo_original>
// kernel: tpu_custom_call.1
$region0: #{tpu_custom_call.1}
  #allocation0 [shape = 'u32[]', space=smem, size = 0x4, offset = 0x4, fixed_abs, tag = 'smem constant byte address 0x4 - core index']
  #allocation1 [shape = 'u32[144,128]{1,0:T(1,128)}', space=vmem, size = 0x12000, scoped, tag = 'internal scratch']
  %s0 = inlined_call_operand.hbm [shape: f32[16,128], index: 0, kind: input, shape index: {}]
  %s1 = inlined_call_operand.hbm [shape: f32[16,128], index: 1, kind: input, shape index: {}]
  %s2 = inlined_call_operand.hbm [shape: f32[16,128], index: 2, kind: output, shape index: {}]
  %s3 = sld [smem:[#allocation0]]
  $region49: #{tpu_custom_call.1} parent=0
    _
  %s5 = ssub.s32 1, %s3
  %s6 = scalar_select 0, %s5, %s3
  $region1: #{tpu_custom_call.1} parent=0
    #allocation2 [shape = 'u8[8192]{0}', space=vmem, size = 0x2000, scoped, tag = 'input window, operand 0']
    #allocation3 [shape = 's32[2]{0}', space=sflag, size = 0x8, scoped, tag = 'scoped memory for tpu_custom_call.1']
    #allocation4 [shape = 's32[2]{0}', space=sflag, size = 0x8, scoped, tag = 'scoped memory for tpu_custom_call.1']
    #allocation5 [shape = 'u8[8192]{0}', space=vmem, size = 0x2000, scoped, tag = 'input window, operand 1']
    #allocation6 [shape = 's32[2]{0}', space=sflag, size = 0x8, scoped, tag = 'scoped memory for tpu_custom_call.1']
    #allocation7 [shape = 'u8[8192]{0}', space=vmem, size = 0x2000, scoped, tag = 'output window, operand 0']
    %7 = vsyncpa [#allocation3], 0
    %s8 = scalar_lea.sflag [#allocation3], 1
    %9 = vsyncpa %s8, 0
    %10 = vsyncpa [#allocation6], 0
    %s11 = scalar_lea.sflag [#allocation6], 1
    %12 = vsyncpa %s11, 0
    %13 = vsyncpa [#allocation4], 0
    %s14 = scalar_lea.sflag [#allocation4], 1
    %15 = vsyncpa %s14, 0
    loop: start=0, step=1, limit=4
    $region2: #{tpu_custom_call.1} parent=1 // loop_pre_header
      _
    $region3: #{tpu_custom_call.1} parent=1 // loop_header
      %s17 = sphi 0, %s21
      %p18 = scmp.ge.s32.totalorder %s17, 4
      %s27 = sphi 0, %s29
      %s30 = sphi 0, %s27
      %s31 = sphi 0, %s30
      %s47 = sphi 0, %s31
      %s53 = sphi 0, %s55
      %s56 = sphi 0, %s53
      %s57 = sphi 0, %s56
      %s73 = sphi 0, %s57
      %s79 = sphi 0, %s81
      %s82 = sphi 0, %s79
      %s83 = sphi 0, %s82
      %s99 = sphi 0, %s83
    $region4: #{tpu_custom_call.1} parent=1 // loop_header_branch
      %20 = sbr.rel (%p18) target = $region8
    $region5: #{tpu_custom_call.1} parent=1 // loop_body
      %s22 = ssub.s32 %s17, 1
      %s23 = ssub.s32 %s17, 2
      %s24 = sadd.s32 %s17, 1
      %s25 = ssub.s32 %s17, %s24
      %p26 = scmp.eq.s32.totalorder %s25, 0
      %s28 = sadd.s32 %s27, 1
      %s29 = scalar_select %p26, %s27, %s28
      %p32 = pneg %p26
      %p33 = scmp.eq.s32.totalorder %s17, 1
      %p34 = por %p32, %p33
      %p35 = scmp.ne.s32.totalorder %s27, %s30
      %p36 = scmp.eq.s32.totalorder %s17, 0
      %p37 = por %p35, %p36
      %p38 = scmp.ne.s32.totalorder %s27, %s30
      %p39 = scmp.eq.s32.totalorder %s22, 1
      %p40 = por %p38, %p39
      %p41 = scmp.ne.s32.totalorder %s30, %s31
      %p42 = scmp.eq.s32.totalorder %s22, 0
      %p43 = por %p41, %p42
      %p44 = scmp.ne.s32.totalorder %s30, %s31
      %p45 = scmp.eq.s32.totalorder %s23, 1
      %p46 = por %p44, %p45
      %p48 = scmp.ne.s32.totalorder %s31, %s47
      %p49 = scmp.eq.s32.totalorder %s23, 0
      %p50 = por %p48, %p49
      %s51 = ssub.s32 %s17, %s24
      %p52 = scmp.eq.s32.totalorder %s51, 0
      %s54 = sadd.s32 %s53, 1
      %s55 = scalar_select %p52, %s53, %s54
      %p58 = pneg %p52
      %p59 = scmp.eq.s32.totalorder %s17, 1
      %p60 = por %p58, %p59
      %p61 = scmp.ne.s32.totalorder %s53, %s56
      %p62 = scmp.eq.s32.totalorder %s17, 0
      %p63 = por %p61, %p62
      %p64 = scmp.ne.s32.totalorder %s53, %s56
      %p65 = scmp.eq.s32.totalorder %s22, 1
      %p66 = por %p64, %p65
      %p67 = scmp.ne.s32.totalorder %s56, %s57
      %p68 = scmp.eq.s32.totalorder %s22, 0
      %p69 = por %p67, %p68
      %p70 = scmp.ne.s32.totalorder %s56, %s57
      %p71 = scmp.eq.s32.totalorder %s23, 1
      %p72 = por %p70, %p71
      %p74 = scmp.ne.s32.totalorder %s57, %s73
      %p75 = scmp.eq.s32.totalorder %s23, 0
      %p76 = por %p74, %p75
      %s77 = ssub.s32 %s17, %s24
      %p78 = scmp.eq.s32.totalorder %s77, 0
      %s80 = sadd.s32 %s79, 1
      %s81 = scalar_select %p78, %s79, %s80
      %p84 = pneg %p78
      %p85 = scmp.eq.s32.totalorder %s17, 1
      %p86 = por %p84, %p85
      %p87 = scmp.ne.s32.totalorder %s79, %s82
      %p88 = scmp.eq.s32.totalorder %s17, 0
      %p89 = por %p87, %p88
      %p90 = scmp.ne.s32.totalorder %s79, %s82
      %p91 = scmp.eq.s32.totalorder %s22, 1
      %p92 = por %p90, %p91
      %p93 = scmp.ne.s32.totalorder %s82, %s83
      %p94 = scmp.eq.s32.totalorder %s22, 0
      %p95 = por %p93, %p94
      %p96 = scmp.ne.s32.totalorder %s82, %s83
      %p97 = scmp.eq.s32.totalorder %s23, 1
      %p98 = por %p96, %p97
      %p100 = scmp.ne.s32.totalorder %s83, %s99
      %p101 = scmp.eq.s32.totalorder %s23, 0
      %p102 = por %p100, %p101
      %p103 = scmp.le.s32.totalorder 1, %s17
      %p104 = scmp.lt.s32.totalorder %s17, 3
      %p105 = pnand %p103, %p104
      %p106 = pneg %p105
      // Predicated region
      $region9: #{tpu_custom_call.1} parent=5 // pred_check
        _
      $region10: #{tpu_custom_call.1} parent=5 // pred_check_branch
        %108 = sbr.rel (%p105) target = $region12
      $region11: #{tpu_custom_call.1} parent=5 // pred_region
        %s109 = ssub.s32 %s17, 1
      $region12: #{tpu_custom_call.1} parent=5 // pred_fallthru
        _
      %p110 = scmp.lt.s32.totalorder %s17, 2
      // Predicated region
      $region13: #{tpu_custom_call.1} parent=5 // pred_check
        %p111 = pneg %p110
      $region14: #{tpu_custom_call.1} parent=5 // pred_check_branch
        %113 = sbr.rel (%p111) target = $region16
      $region15: #{tpu_custom_call.1} parent=5 // pred_region
        // Predicated region
        $region17: #{tpu_custom_call.1} parent=15 // pred_check
          %p114 = pneg %p37
        $region18: #{tpu_custom_call.1} parent=15 // pred_check_branch
          %116 = sbr.rel (%p114) target = $region20
        $region19: #{tpu_custom_call.1} parent=15 // pred_region
          %s117 = sand.u32 %s27, 1
          %s118 = scalar_lea.sflag [#allocation3], %s117
          %s119 = sand.u32 %s27, 1
          %s120 = smul.addr %s119, 8
          %s121 = scalar_lea.vmem [#allocation2], %s120
          %s123 = ssub.s32 128, 128
          %124 = vsyncadd %s118, %s123
          %s125 = smul.addr %s17, 128
          %s126 = scalar_lea.hbm %s0, %s125
          %s128 = sshll.u32 %s121, 4
          %s129 = int_to_ptr.vmem [resolvable:$true] %s128
          %131 = dma.hbm_to_vmem [thread:$0]  %s126, 128, %s129, %s118
        $region20: #{tpu_custom_call.1} parent=15 // pred_fallthru
          _
        // Predicated region
        $region21: #{tpu_custom_call.1} parent=15 // pred_check
          %p132 = pneg %p63
        $region22: #{tpu_custom_call.1} parent=15 // pred_check_branch
          %134 = sbr.rel (%p132) target = $region24
        $region23: #{tpu_custom_call.1} parent=15 // pred_region
          %s135 = sand.u32 %s53, 1
          %s136 = scalar_lea.sflag [#allocation6], %s135
          %s137 = sand.u32 %s53, 1
          %s138 = smul.addr %s137, 8
          %s139 = scalar_lea.vmem [#allocation5], %s138
          %s141 = ssub.s32 128, 128
          %142 = vsyncadd %s136, %s141
          %s143 = smul.addr %s17, 128
          %s144 = scalar_lea.hbm %s1, %s143
          %s146 = sshll.u32 %s139, 4
          %s147 = int_to_ptr.vmem [resolvable:$true] %s146
          %149 = dma.hbm_to_vmem [thread:$0]  %s144, 128, %s147, %s136
        $region24: #{tpu_custom_call.1} parent=15 // pred_fallthru
          _
      $region16: #{tpu_custom_call.1} parent=5 // pred_fallthru
        _
      %p150 = scmp.le.s32.totalorder 1, %s17
      %p151 = scmp.lt.s32.totalorder %s17, 3
      %p152 = pnand %p150, %p151
      %p153 = pneg %p152
      // Predicated region
      $region25: #{tpu_custom_call.1} parent=5 // pred_check
        _
      $region26: #{tpu_custom_call.1} parent=5 // pred_check_branch
        %155 = sbr.rel (%p152) target = $region28
      $region27: #{tpu_custom_call.1} parent=5 // pred_region
        %s156 = ssub.s32 %s17, 1
        %s157 = sand.u32 %s30, 1
        %s158 = scalar_lea.sflag [#allocation3], %s157
        %s159 = sand.u32 %s30, 1
        %s160 = smul.addr %s159, 8
        %s161 = scalar_lea.vmem [#allocation2], %s160
        // Predicated region
        $region29: #{tpu_custom_call.1} parent=27 // pred_check
          %p162 = pneg %p43
        $region30: #{tpu_custom_call.1} parent=27 // pred_check_branch
          %164 = sbr.rel (%p162) target = $region32
        $region31: #{tpu_custom_call.1} parent=27 // pred_region
          %165 = dma.done %s158, 128
        $region32: #{tpu_custom_call.1} parent=27 // pred_fallthru
          _
        %s166 = sand.u32 %s56, 1
        %s167 = scalar_lea.sflag [#allocation6], %s166
        %s168 = sand.u32 %s56, 1
        %s169 = smul.addr %s168, 8
        %s170 = scalar_lea.vmem [#allocation5], %s169
        // Predicated region
        $region33: #{tpu_custom_call.1} parent=27 // pred_check
          %p171 = pneg %p69
        $region34: #{tpu_custom_call.1} parent=27 // pred_check_branch
          %173 = sbr.rel (%p171) target = $region36
        $region35: #{tpu_custom_call.1} parent=27 // pred_region
          %174 = dma.done %s167, 128
        $region36: #{tpu_custom_call.1} parent=27 // pred_fallthru
          _
        %s175 = sand.u32 %s30, 1
        %s176 = scalar_lea.sflag [#allocation3], %s175
        %s177 = sand.u32 %s30, 1
        %s178 = smul.addr %s177, 8
        %s179 = scalar_lea.vmem [#allocation2], %s178
        %p180 = pneg %p43
        %p181 = pneg %p40
        %s182 = sand.u32 %s56, 1
        %s183 = scalar_lea.sflag [#allocation6], %s182
        %s184 = sand.u32 %s56, 1
        %s185 = smul.addr %s184, 8
        %s186 = scalar_lea.vmem [#allocation5], %s185
        %p187 = pneg %p69
        %p188 = pneg %p66
        %p189 = pneg %p95
        %p190 = pneg %p92
        %s191 = sand.u32 %s82, 1
        %s192 = scalar_lea.sflag [#allocation4], %s191
        %s193 = sand.u32 %s82, 1
        %s194 = smul.addr %s193, 8
        %s195 = scalar_lea.vmem [#allocation7], %s194
        %v196 = vld [vmem:[%s161] sm:$0xff]
        %v197 = vld [vmem:[%s170] sm:$0xff]
        %v198 = vsub.f32 %v196, %v197
        %v199 = vand.u32 2147483647, %v198
        %vm200 = vcmp.gt.f32.partialorder %v197, 0.02
        %v201 = vmul.f32 %v199, 0.1
        %v202 = vsel %vm200, %v199, %v201
        %203 = vst [vmem:[%s195] sm:$0xff] %v202
        %s204 = sand.u32 %s82, 1
        %s205 = scalar_lea.sflag [#allocation4], %s204
        %s206 = sand.u32 %s82, 1
        %s207 = smul.addr %s206, 8
        %s208 = scalar_lea.vmem [#allocation7], %s207
        // Predicated region
        $region37: #{tpu_custom_call.1} parent=27 // pred_check
          %p209 = pneg %p92
        $region38: #{tpu_custom_call.1} parent=27 // pred_check_branch
          %211 = sbr.rel (%p209) target = $region40
        $region39: #{tpu_custom_call.1} parent=27 // pred_region
          %s213 = ssub.s32 128, 128
          %214 = vsyncadd %s205, %s213
          %s215 = smul.addr %s22, 128
          %s216 = scalar_lea.hbm %s2, %s215
          %s218 = sshll.u32 %s208, 4
          %s219 = int_to_ptr.vmem [resolvable:$true] %s218
          %221 = dma.vmem_to_hbm [thread:$0]  %s219, 128, %s216, %s205
        $region40: #{tpu_custom_call.1} parent=27 // pred_fallthru
          _
      $region28: #{tpu_custom_call.1} parent=5 // pred_fallthru
        _
      %p222 = scmp.le.s32.totalorder 2, %s17
      // Predicated region
      $region41: #{tpu_custom_call.1} parent=5 // pred_check
        %p223 = pneg %p222
      $region42: #{tpu_custom_call.1} parent=5 // pred_check_branch
        %225 = sbr.rel (%p223) target = $region44
      $region43: #{tpu_custom_call.1} parent=5 // pred_region
        %s226 = ssub.s32 %s17, 2
        // Predicated region
        $region45: #{tpu_custom_call.1} parent=43 // pred_check
          %p227 = pneg %p98
        $region46: #{tpu_custom_call.1} parent=43 // pred_check_branch
          %229 = sbr.rel (%p227) target = $region48
        $region47: #{tpu_custom_call.1} parent=43 // pred_region
          %s230 = sand.u32 %s83, 1
          %s231 = scalar_lea.sflag [#allocation4], %s230
          %s232 = sand.u32 %s83, 1
          %s233 = smul.addr %s232, 8
          %s234 = scalar_lea.vmem [#allocation7], %s233
          %235 = dma.done %s231, 128
        $region48: #{tpu_custom_call.1} parent=43 // pred_fallthru
          _
      $region44: #{tpu_custom_call.1} parent=5 // pred_fallthru
        _
    $region6: #{tpu_custom_call.1} parent=1 // loop_footer
      %s21 = sadd.s32 1, %s17
    $region7: #{tpu_custom_call.1} parent=1 // loop_footer_branch
      %16 = sbr.rel target = $region3
    $region8: #{tpu_custom_call.1} parent=1 // loop_exit
      _
    %236 = vsyncpa [#allocation3], 1
    %s237 = scalar_lea.sflag [#allocation3], 1
    %238 = vsyncpa %s237, 1
    %239 = vsyncpa [#allocation6], 1
    %s240 = scalar_lea.sflag [#allocation6], 1
    %241 = vsyncpa %s240, 1
    %242 = vsyncpa [#allocation4], 1
    %s243 = scalar_lea.sflag [#allocation4], 1
    %244 = vsyncpa %s243, 1

</llo_original>
